<compile_context>
chip_gen: v5e
topology: v5e:2x2
jax: 0.10.0
libtpu: 0.0.40
codegen_flags: <defaults>
</compile_context>

<pallas_src>
import math

import jax
import jax.numpy as jnp
from jax import lax
from jax.experimental import pallas as pl
from jax.experimental.pallas import tpu as pltpu


def _round_up(x, m):
    return ((x + m - 1) // m) * m


def _num_tensorcores():
    """Best-effort TensorCore count (v7x: 2 per chip).  Falls back to 1."""
    try:
        return max(1, int(getattr(jax.devices()[0], "num_cores", 1)))
    except Exception:
        return 1


def _mlp_kernel(x_ref, w1_ref, b1_ref, w2_ref, b2_ref, w3_ref, b3_ref,
                wl_ref, bl_ref, oT_ref):
    """One batch tile of the fused 4-layer MLP.

    x_ref : (block_b, IN)  f32  -- natural layout, no wrapper transpose.
    w*_ref: (out, in)      bf16 -- PyTorch layout, resident in VMEM.
    b*_ref: (out, 1)       f32.
    oT_ref: (OUT, block_b) f32  -- batch on lanes (unmasked, lane-dense stores).
    """
    x_bf = x_ref[...].astype(jnp.bfloat16)

    # h = W1 @ x^T without materializing x^T: contract the last dim of BOTH
    # operands (the q @ k.T pattern).  Result is (H0, block_b): batch on lanes
    # for every subsequent layer; MXU N-dim = block_b.
    h = lax.dot_general(w1_ref[...], x_bf, (((1,), (1,)), ((), ())),
                        preferred_element_type=jnp.float32)
    h = jnp.maximum(h + b1_ref[...], 0.0)

    # hidden layer 1 (layers[0]) + ReLU
    h = jnp.dot(w2_ref[...], h.astype(jnp.bfloat16),
                preferred_element_type=jnp.float32)
    h = jnp.maximum(h + b2_ref[...], 0.0)

    # hidden layer 2 (layers[1]) + ReLU
    h = jnp.dot(w3_ref[...], h.astype(jnp.bfloat16),
                preferred_element_type=jnp.float32)
    h = jnp.maximum(h + b3_ref[...], 0.0)

    # last linear (no activation)
    out = jnp.dot(wl_ref[...], h.astype(jnp.bfloat16),
                  preferred_element_type=jnp.float32) + bl_ref[...]
    oT_ref[...] = out.astype(oT_ref.dtype)


def _choose_block_b(B):
    ncores = _num_tensorcores()
    cap = 16384 if ncores >= 2 else 8192
    bp = _round_up(B, 128)
    if ncores >= 2 and bp >= 2 * 128:
        # Keep grid >= ncores so every TensorCore gets a share of the batch.
        per_core = _round_up(pl.cdiv(bp, ncores), 128)
        return max(128, min(cap, per_core))
    return max(128, min(cap, bp))


def predictor_forward(x, params, *, block_b=None):
    """Fused MLP forward.

    x: (B, input_size) float32.
    params: ((W1,b1),(W2,b2),(W3,b3),(WL,bL)) with W in PyTorch (out, in) layout
            and b as (out, 1) column vectors (float32).
    Returns (B, output_size) float32.
    """
    (w1, b1), (w2, b2), (w3, b3), (wl, bl) = params
    B, IN = x.shape
    H0, H1, H2, OUT = w1.shape[0], w2.shape[0], w3.shape[0], wl.shape[0]

    if block_b is None:
        block_b = _choose_block_b(B)
    block_b = _round_up(max(128, int(block_b)), 128)

    # Pad the batch up to a multiple of block_b (zero rows; sliced off after),
    # instead of collapsing to one giant whole-batch block.
    Bp = _round_up(B, block_b)
    if Bp != B:
        x = jnp.pad(x, ((0, Bp - B), (0, 0)))
    grid = Bp // block_b

    # bf16 MXU operands: weights cast once here; activations cast in-kernel.
    w1b, w2b, w3b, wlb = (w.astype(jnp.bfloat16) for w in (w1, w2, w3, wl))

    full = lambda shape: pl.BlockSpec(shape, lambda i: (0, 0))

    flops = 2 * Bp * (IN * H0 + H0 * H1 + H1 * H2 + H2 * OUT)
    bytes_accessed = (4 * (Bp * IN + Bp * OUT)
                      + 2 * (w1.size + w2.size + w3.size + wl.size)
                      + 4 * (b1.size + b2.size + b3.size + bl.size))

    # Explicit scoped-VMEM budget covering the chosen tile (double-buffered x and
    # out tiles + f32 intermediates + resident weights), with generous headroom
    # but safely under v7x's 64 MiB physical VMEM.
    hmax = max(H0, H1, H2)
    vmem_bytes = (2 * block_b * IN * 4
                  + 2 * block_b * OUT * 4
                  + 4 * block_b * hmax * 4
                  + 2 * 2 * (w1.size + w2.size + w3.size + wl.size)
                  + 2 * 4 * (b1.size + b2.size + b3.size + bl.size))
    vmem_limit = int(min(48 * 1024 * 1024, max(32 * 1024 * 1024, 2 * vmem_bytes)))

    yT = pl.pallas_call(
        _mlp_kernel,
        out_shape=jax.ShapeDtypeStruct((OUT, Bp), jnp.float32),
        grid_spec=pl.GridSpec(
            grid=(grid,),
            in_specs=[
                pl.BlockSpec((block_b, IN), lambda i: (i, 0)),   # x tile (streamed)
                full((H0, IN)), full((H0, 1)),                   # first      (resident)
                full((H1, H0)), full((H1, 1)),                   # layers[0]  (resident)
                full((H2, H1)), full((H2, 1)),                   # layers[1]  (resident)
                full((OUT, H2)), full((OUT, 1)),                 # last       (resident)
            ],
            out_specs=pl.BlockSpec((OUT, block_b), lambda i: (0, i)),
        ),
        compiler_params=pltpu.CompilerParams(
            dimension_semantics=("parallel",),
            vmem_limit_bytes=vmem_limit),
        cost_estimate=pl.CostEstimate(
            flops=flops, transcendentals=0, bytes_accessed=bytes_accessed),
    )(x, w1b, b1, w2b, b2, w3b, b3, wlb, bl)

    return yT[:, :B].T  # (B, OUT)


def _init_linear(key, fan_in, fan_out):
    """Deterministic init mimicking PyTorch nn.Linear default (uniform +-1/sqrt(fan_in)).

    Returns W with shape (fan_out, fan_in) (PyTorch layout) and b (fan_out, 1)."""
    kw, kb = jax.random.split(key)
    bound = 1.0 / math.sqrt(fan_in)
    w = jax.random.uniform(kw, (fan_out, fan_in), jnp.float32, -bound, bound)
    b = jax.random.uniform(kb, (fan_out, 1), jnp.float32, -bound, bound)
    return w, b


def _reference_forward(x, params):
    (w1, b1), (w2, b2), (w3, b3), (wl, bl) = params
    h = jnp.maximum(x @ w1.T + b1.T, 0.0)
    h = jnp.maximum(h @ w2.T + b2.T, 0.0)
    h = jnp.maximum(h @ w3.T + b3.T, 0.0)
    return h @ wl.T + bl.T


if __name__ == "__main__":
    # Predictor(input_size=16, arch=[32, 32, 32], output_size=1)
    IN, H, OUT = 16, 32, 1
    B = 512  # auto block_b: whole batch on single-TC chips, split across TCs on v7x

    key = jax.random.PRNGKey(0)
    kx, k1, k2, k3, k4 = jax.random.split(key, 5)

    x = jax.random.normal(kx, (B, IN), jnp.float32)
    params = (
        _init_linear(k1, IN, H),   # first:      in -> arch[0]
        _init_linear(k2, H, H),    # layers[0]:  arch[0] -> arch[1]
        _init_linear(k3, H, H),    # layers[1]:  arch[1] -> arch[2]
        _init_linear(k4, H, OUT),  # last:       arch[-1] -> output_size
    )

    y = predictor_forward(x, params)
    y = jax.block_until_ready(y)

    y_ref = _reference_forward(x, params)
    assert y.shape == (B, OUT)
    # bf16 MXU operands with f32 accumulation -> looser tolerance vs f32 reference.
    assert jnp.allclose(y, y_ref, atol=5e-2, rtol=5e-2), "mismatch vs pure-JAX reference"

    print("KERNEL_OK")
</pallas_src>

<mosaic_0001>
module attributes {stable_mosaic.version = 11 : i64} {
  func.func @_mlp_kernel(%arg0: i32, %arg1: memref<512x16xf32, #tpu.memory_space<vmem>>, %arg2: memref<32x16xbf16, #tpu.memory_space<vmem>>, %arg3: memref<32x1xf32, #tpu.memory_space<vmem>>, %arg4: memref<32x32xbf16, #tpu.memory_space<vmem>>, %arg5: memref<32x1xf32, #tpu.memory_space<vmem>>, %arg6: memref<32x32xbf16, #tpu.memory_space<vmem>>, %arg7: memref<32x1xf32, #tpu.memory_space<vmem>>, %arg8: memref<1x32xbf16, #tpu.memory_space<vmem>>, %arg9: memref<1x1xf32, #tpu.memory_space<vmem>>, %arg10: memref<1x512xf32, #tpu.memory_space<vmem>>) attributes {dimension_semantics = [#tpu.dimension_semantics<parallel>], iteration_bounds = array<i64: 1>, scalar_prefetch = 0 : i64, scratch_operands = 0 : i64, tpu.core_type = #tpu.core_type<tc>, window_params = [{transform_indices = @transform_0, window_bounds = array<i64: 512, 16>}, {pipeline_mode = #tpu.pipeline_mode<synchronous>, transform_indices = @transform_1, window_bounds = array<i64: 32, 16>}, {pipeline_mode = #tpu.pipeline_mode<synchronous>, transform_indices = @transform_2, window_bounds = array<i64: 32, 1>}, {pipeline_mode = #tpu.pipeline_mode<synchronous>, transform_indices = @transform_3, window_bounds = array<i64: 32, 32>}, {pipeline_mode = #tpu.pipeline_mode<synchronous>, transform_indices = @transform_4, window_bounds = array<i64: 32, 1>}, {pipeline_mode = #tpu.pipeline_mode<synchronous>, transform_indices = @transform_5, window_bounds = array<i64: 32, 32>}, {pipeline_mode = #tpu.pipeline_mode<synchronous>, transform_indices = @transform_6, window_bounds = array<i64: 32, 1>}, {pipeline_mode = #tpu.pipeline_mode<synchronous>, transform_indices = @transform_7, window_bounds = array<i64: 1, 32>}, {pipeline_mode = #tpu.pipeline_mode<synchronous>, transform_indices = @transform_8, window_bounds = array<i64: 1, 1>}, {transform_indices = @transform_9, window_bounds = array<i64: 1, 512>}]} {
    %c0 = arith.constant 0 : index
    %c0_0 = arith.constant 0 : index
    %0 = vector.load %arg1[%c0, %c0_0] : memref<512x16xf32, #tpu.memory_space<vmem>>, vector<512x16xf32>
    %1 = arith.truncf %0 : vector<512x16xf32> to vector<512x16xbf16>
    %c0_1 = arith.constant 0 : index
    %c0_2 = arith.constant 0 : index
    %2 = vector.load %arg2[%c0_1, %c0_2] : memref<32x16xbf16, #tpu.memory_space<vmem>>, vector<32x16xbf16>
    %cst = arith.constant dense<0.000000e+00> : vector<32x512xf32>
    %3 = tpu.matmul %2, %1, %cst {dimension_numbers = #tpu.dot_dimension_numbers<[1], [1], [0], [0], [0, 0, 1, 0], [], []>} : vector<32x16xbf16>, vector<512x16xbf16>, vector<32x512xf32> -> vector<32x512xf32>
    %c0_3 = arith.constant 0 : index
    %c0_4 = arith.constant 0 : index
    %4 = vector.load %arg3[%c0_3, %c0_4] : memref<32x1xf32, #tpu.memory_space<vmem>>, vector<32x1xf32>
    %5 = vector.broadcast %4 : vector<32x1xf32> to vector<32x512xf32>
    %6 = arith.addf %3, %5 : vector<32x512xf32>
    %cst_5 = arith.constant 0.000000e+00 : f32
    %7 = vector.broadcast %cst_5 : f32 to vector<32x512xf32>
    %8 = arith.maximumf %6, %7 : vector<32x512xf32>
    %c0_6 = arith.constant 0 : index
    %c0_7 = arith.constant 0 : index
    %9 = vector.load %arg4[%c0_6, %c0_7] : memref<32x32xbf16, #tpu.memory_space<vmem>>, vector<32x32xbf16>
    %10 = arith.truncf %8 : vector<32x512xf32> to vector<32x512xbf16>
    %cst_8 = arith.constant dense<0.000000e+00> : vector<32x512xf32>
    %11 = tpu.matmul %9, %10, %cst_8 {dimension_numbers = #tpu.dot_dimension_numbers<[1], [0], [0], [1], [0, 0, 1, 1], [], []>} : vector<32x32xbf16>, vector<32x512xbf16>, vector<32x512xf32> -> vector<32x512xf32>
    %c0_9 = arith.constant 0 : index
    %c0_10 = arith.constant 0 : index
    %12 = vector.load %arg5[%c0_9, %c0_10] : memref<32x1xf32, #tpu.memory_space<vmem>>, vector<32x1xf32>
    %13 = vector.broadcast %12 : vector<32x1xf32> to vector<32x512xf32>
    %14 = arith.addf %11, %13 : vector<32x512xf32>
    %cst_11 = arith.constant 0.000000e+00 : f32
    %15 = vector.broadcast %cst_11 : f32 to vector<32x512xf32>
    %16 = arith.maximumf %14, %15 : vector<32x512xf32>
    %c0_12 = arith.constant 0 : index
    %c0_13 = arith.constant 0 : index
    %17 = vector.load %arg6[%c0_12, %c0_13] : memref<32x32xbf16, #tpu.memory_space<vmem>>, vector<32x32xbf16>
    %18 = arith.truncf %16 : vector<32x512xf32> to vector<32x512xbf16>
    %cst_14 = arith.constant dense<0.000000e+00> : vector<32x512xf32>
    %19 = tpu.matmul %17, %18, %cst_14 {dimension_numbers = #tpu.dot_dimension_numbers<[1], [0], [0], [1], [0, 0, 1, 1], [], []>} : vector<32x32xbf16>, vector<32x512xbf16>, vector<32x512xf32> -> vector<32x512xf32>
    %c0_15 = arith.constant 0 : index
    %c0_16 = arith.constant 0 : index
    %20 = vector.load %arg7[%c0_15, %c0_16] : memref<32x1xf32, #tpu.memory_space<vmem>>, vector<32x1xf32>
    %21 = vector.broadcast %20 : vector<32x1xf32> to vector<32x512xf32>
    %22 = arith.addf %19, %21 : vector<32x512xf32>
    %cst_17 = arith.constant 0.000000e+00 : f32
    %23 = vector.broadcast %cst_17 : f32 to vector<32x512xf32>
    %24 = arith.maximumf %22, %23 : vector<32x512xf32>
    %c0_18 = arith.constant 0 : index
    %c0_19 = arith.constant 0 : index
    %25 = vector.load %arg8[%c0_18, %c0_19] : memref<1x32xbf16, #tpu.memory_space<vmem>>, vector<1x32xbf16>
    %26 = arith.truncf %24 : vector<32x512xf32> to vector<32x512xbf16>
    %cst_20 = arith.constant dense<0.000000e+00> : vector<1x512xf32>
    %27 = tpu.matmul %25, %26, %cst_20 {dimension_numbers = #tpu.dot_dimension_numbers<[1], [0], [0], [1], [0, 0, 1, 1], [], []>} : vector<1x32xbf16>, vector<32x512xbf16>, vector<1x512xf32> -> vector<1x512xf32>
    %c0_21 = arith.constant 0 : index
    %c0_22 = arith.constant 0 : index
    %28 = vector.load %arg9[%c0_21, %c0_22] : memref<1x1xf32, #tpu.memory_space<vmem>>, vector<1x1xf32>
    %29 = vector.broadcast %28 : vector<1x1xf32> to vector<1x512xf32>
    %30 = arith.addf %27, %29 : vector<1x512xf32>
    %c0_23 = arith.constant 0 : index
    %c0_24 = arith.constant 0 : index
    %31 = vector.load %arg10[%c0_23, %c0_24] : memref<1x512xf32, #tpu.memory_space<vmem>>, vector<1x512xf32>
    tpu.vector_store %arg10[%c0_23, %c0_24], %30 {strides = array<i32>} : memref<1x512xf32, #tpu.memory_space<vmem>>, vector<1x512xf32>,
    return
  }
  func.func @transform_0(%arg0: i32) -> (i32, i32) {
    %c0_i32 = arith.constant 0 : i32
    %c0_i32_0 = arith.constant 0 : i32
    return %arg0, %c0_i32 : i32, i32
  }
  func.func @transform_1(%arg0: i32) -> (i32, i32) {
    %c0_i32 = arith.constant 0 : i32
    %c0_i32_0 = arith.constant 0 : i32
    %c0_i32_1 = arith.constant 0 : i32
    return %c0_i32, %c0_i32_0 : i32, i32
  }
  func.func @transform_2(%arg0: i32) -> (i32, i32) {
    %c0_i32 = arith.constant 0 : i32
    %c0_i32_0 = arith.constant 0 : i32
    %c0_i32_1 = arith.constant 0 : i32
    return %c0_i32, %c0_i32_0 : i32, i32
  }
  func.func @transform_3(%arg0: i32) -> (i32, i32) {
    %c0_i32 = arith.constant 0 : i32
    %c0_i32_0 = arith.constant 0 : i32
    %c0_i32_1 = arith.constant 0 : i32
    return %c0_i32, %c0_i32_0 : i32, i32
  }
  func.func @transform_4(%arg0: i32) -> (i32, i32) {
    %c0_i32 = arith.constant 0 : i32
    %c0_i32_0 = arith.constant 0 : i32
    %c0_i32_1 = arith.constant 0 : i32
    return %c0_i32, %c0_i32_0 : i32, i32
  }
  func.func @transform_5(%arg0: i32) -> (i32, i32) {
    %c0_i32 = arith.constant 0 : i32
    %c0_i32_0 = arith.constant 0 : i32
    %c0_i32_1 = arith.constant 0 : i32
    return %c0_i32, %c0_i32_0 : i32, i32
  }
  func.func @transform_6(%arg0: i32) -> (i32, i32) {
    %c0_i32 = arith.constant 0 : i32
    %c0_i32_0 = arith.constant 0 : i32
    %c0_i32_1 = arith.constant 0 : i32
    return %c0_i32, %c0_i32_0 : i32, i32
  }
  func.func @transform_7(%arg0: i32) -> (i32, i32) {
    %c0_i32 = arith.constant 0 : i32
    %c0_i32_0 = arith.constant 0 : i32
    %c0_i32_1 = arith.constant 0 : i32
    return %c0_i32, %c0_i32_0 : i32, i32
  }
  func.func @transform_8(%arg0: i32) -> (i32, i32) {
    %c0_i32 = arith.constant 0 : i32
    %c0_i32_0 = arith.constant 0 : i32
    %c0_i32_1 = arith.constant 0 : i32
    return %c0_i32, %c0_i32_0 : i32, i32
  }
  func.func @transform_9(%arg0: i32) -> (i32, i32) {
    %c0_i32 = arith.constant 0 : i32
    %c0_i32_0 = arith.constant 0 : i32
    return %c0_i32, %arg0 : i32, i32
  }
}

</mosaic_0001>

<llo_original>
// kernel: tpu_custom_call.1
$region0: #{tpu_custom_call.1}
  #allocation0 [shape = 'u32[]', space=smem, size = 0x4, offset = 0x4, fixed_abs, tag = 'smem constant byte address 0x4 - core index']
  #allocation1 [shape = 'u32[72,128]{1,0:T(1,128)}', space=vmem, size = 0x9000, scoped, tag = 'internal scratch']
  #allocation2 [shape = 'f32[1,1]{1,0:T(1,128)S(1)}', space=vmem, size = 0x200, scoped, tag = 'scoped memory for tpu_custom_call.1']
  %s0 = inlined_call_operand.vmem [shape: f32[512,16], index: 0, kind: input, shape index: {}]
  %s1 = inlined_call_operand.vmem [shape: bf16[32,16], index: 1, kind: input, shape index: {}]
  %s2 = inlined_call_operand.vmem [shape: f32[32,1], index: 2, kind: input, shape index: {}]
  %s3 = inlined_call_operand.vmem [shape: bf16[32,32], index: 3, kind: input, shape index: {}]
  %s4 = inlined_call_operand.vmem [shape: f32[32,1], index: 4, kind: input, shape index: {}]
  %s5 = inlined_call_operand.vmem [shape: bf16[32,32], index: 5, kind: input, shape index: {}]
  %s6 = inlined_call_operand.vmem [shape: f32[32,1], index: 6, kind: input, shape index: {}]
  %s7 = inlined_call_operand.vmem [shape: bf16[1,32], index: 7, kind: input, shape index: {}]
  %s8 = inlined_call_operand.<no memory space> [shape: f32[1,1], index: 8, kind: input, shape index: {}]
  %s9 = inlined_call_operand.hbm [shape: f32[1,512], index: 9, kind: output, shape index: {}]
  %s10 = sld [smem:[#allocation0]]
  $region46: #{tpu_custom_call.1} parent=0
    _
  %s12 = ssub.s32 1, %s10
  %s13 = scalar_select 0, %s12, %s10
  %v14 = vstv %s8
  %15 = vst [vmem:[#allocation2] sm:$0x1] %v14
  $region1: #{tpu_custom_call.1} parent=0
    #allocation3 [shape = 'u8[2048]{0}', space=vmem, size = 0x800, scoped, tag = 'output window, operand 0, single buffered']
    #allocation4 [shape = 's32[1]{0}', space=sflag, size = 0x4, scoped, tag = 'scoped memory for tpu_custom_call.1']
    %16 = vsyncpa [#allocation4], 0
    // Predicated region
    $region2: #{tpu_custom_call.1} parent=1 // pred_check
      _
    $region3: #{tpu_custom_call.1} parent=1 // pred_check_branch
      %18 = sbr.rel (0) target = $region5
    $region4: #{tpu_custom_call.1} parent=1 // pred_region
      _
    $region5: #{tpu_custom_call.1} parent=1 // pred_fallthru
      _
    // Predicated region
    $region6: #{tpu_custom_call.1} parent=1 // pred_check
      _
    $region7: #{tpu_custom_call.1} parent=1 // pred_check_branch
      %20 = sbr.rel (0) target = $region9
    $region8: #{tpu_custom_call.1} parent=1 // pred_region
      _
    $region9: #{tpu_custom_call.1} parent=1 // pred_fallthru
      _
    // Predicated region
    $region10: #{tpu_custom_call.1} parent=1 // pred_check
      _
    $region11: #{tpu_custom_call.1} parent=1 // pred_check_branch
      %22 = sbr.rel (0) target = $region13
    $region12: #{tpu_custom_call.1} parent=1 // pred_region
      _
    $region13: #{tpu_custom_call.1} parent=1 // pred_fallthru
      _
    // Predicated region
    $region14: #{tpu_custom_call.1} parent=1 // pred_check
      _
    $region15: #{tpu_custom_call.1} parent=1 // pred_check_branch
      %24 = sbr.rel (0) target = $region17
    $region16: #{tpu_custom_call.1} parent=1 // pred_region
      _
    $region17: #{tpu_custom_call.1} parent=1 // pred_fallthru
      _
    // Predicated region
    $region18: #{tpu_custom_call.1} parent=1 // pred_check
      _
    $region19: #{tpu_custom_call.1} parent=1 // pred_check_branch
      %26 = sbr.rel (0) target = $region21
    $region20: #{tpu_custom_call.1} parent=1 // pred_region
      _
    $region21: #{tpu_custom_call.1} parent=1 // pred_fallthru
      _
    // Predicated region
    $region22: #{tpu_custom_call.1} parent=1 // pred_check
      _
    $region23: #{tpu_custom_call.1} parent=1 // pred_check_branch
      %28 = sbr.rel (0) target = $region25
    $region24: #{tpu_custom_call.1} parent=1 // pred_region
      _
    $region25: #{tpu_custom_call.1} parent=1 // pred_fallthru
      _
    // Predicated region
    $region26: #{tpu_custom_call.1} parent=1 // pred_check
      _
    $region27: #{tpu_custom_call.1} parent=1 // pred_check_branch
      %30 = sbr.rel (0) target = $region29
    $region28: #{tpu_custom_call.1} parent=1 // pred_region
      _
    $region29: #{tpu_custom_call.1} parent=1 // pred_fallthru
      _
    // Predicated region
    $region30: #{tpu_custom_call.1} parent=1 // pred_check
      _
    $region31: #{tpu_custom_call.1} parent=1 // pred_check_branch
      %32 = sbr.rel (0) target = $region33
    $region32: #{tpu_custom_call.1} parent=1 // pred_region
      _
    $region33: #{tpu_custom_call.1} parent=1 // pred_fallthru
      _
    // Predicated region
    $region34: #{tpu_custom_call.1} parent=1 // pred_check
      _
    $region35: #{tpu_custom_call.1} parent=1 // pred_check_branch
      %34 = sbr.rel (0) target = $region37
    $region36: #{tpu_custom_call.1} parent=1 // pred_region
      _
    $region37: #{tpu_custom_call.1} parent=1 // pred_fallthru
      _
    %v36 = vld [vmem:[%s0] sm:$0xff]
    %v37 = vld [vmem:[%s0 + $0x8] sm:$0xff]
    %v38 = vld [vmem:[%s0 + $0x10] sm:$0xff]
    %v39 = vld [vmem:[%s0 + $0x18] sm:$0xff]
    %v40 = vld [vmem:[%s0 + $0x20] sm:$0xff]
    %v41 = vld [vmem:[%s0 + $0x28] sm:$0xff]
    %v42 = vld [vmem:[%s0 + $0x30] sm:$0xff]
    %v43 = vld [vmem:[%s0 + $0x38] sm:$0xff]
    %v44 = vld [vmem:[%s0 + $0x40] sm:$0xff]
    %v45 = vld [vmem:[%s0 + $0x48] sm:$0xff]
    %v46 = vld [vmem:[%s0 + $0x50] sm:$0xff]
    %v47 = vld [vmem:[%s0 + $0x58] sm:$0xff]
    %v48 = vld [vmem:[%s0 + $0x60] sm:$0xff]
    %v49 = vld [vmem:[%s0 + $0x68] sm:$0xff]
    %v50 = vld [vmem:[%s0 + $0x70] sm:$0xff]
    %v51 = vld [vmem:[%s0 + $0x78] sm:$0xff]
    %v52 = vld [vmem:[%s0 + $0x80] sm:$0xff]
    %v53 = vld [vmem:[%s0 + $0x88] sm:$0xff]
    %v54 = vld [vmem:[%s0 + $0x90] sm:$0xff]
    %v55 = vld [vmem:[%s0 + $0x98] sm:$0xff]
    %v56 = vld [vmem:[%s0 + $0xa0] sm:$0xff]
    %v57 = vld [vmem:[%s0 + $0xa8] sm:$0xff]
    %v58 = vld [vmem:[%s0 + $0xb0] sm:$0xff]
    %v59 = vld [vmem:[%s0 + $0xb8] sm:$0xff]
    %v60 = vld [vmem:[%s0 + $0xc0] sm:$0xff]
    %v61 = vld [vmem:[%s0 + $0xc8] sm:$0xff]
    %v62 = vld [vmem:[%s0 + $0xd0] sm:$0xff]
    %v63 = vld [vmem:[%s0 + $0xd8] sm:$0xff]
    %v64 = vld [vmem:[%s0 + $0xe0] sm:$0xff]
    %v65 = vld [vmem:[%s0 + $0xe8] sm:$0xff]
    %v66 = vld [vmem:[%s0 + $0xf0] sm:$0xff]
    %v67 = vld [vmem:[%s0 + $0xf8] sm:$0xff]
    %v68 = vld [vmem:[%s0 + $0x100] sm:$0xff]
    %v69 = vld [vmem:[%s0 + $0x108] sm:$0xff]
    %v70 = vld [vmem:[%s0 + $0x110] sm:$0xff]
    %v71 = vld [vmem:[%s0 + $0x118] sm:$0xff]
    %v72 = vld [vmem:[%s0 + $0x120] sm:$0xff]
    %v73 = vld [vmem:[%s0 + $0x128] sm:$0xff]
    %v74 = vld [vmem:[%s0 + $0x130] sm:$0xff]
    %v75 = vld [vmem:[%s0 + $0x138] sm:$0xff]
    %v76 = vld [vmem:[%s0 + $0x140] sm:$0xff]
    %v77 = vld [vmem:[%s0 + $0x148] sm:$0xff]
    %v78 = vld [vmem:[%s0 + $0x150] sm:$0xff]
    %v79 = vld [vmem:[%s0 + $0x158] sm:$0xff]
    %v80 = vld [vmem:[%s0 + $0x160] sm:$0xff]
    %v81 = vld [vmem:[%s0 + $0x168] sm:$0xff]
    %v82 = vld [vmem:[%s0 + $0x170] sm:$0xff]
    %v83 = vld [vmem:[%s0 + $0x178] sm:$0xff]
    %v84 = vld [vmem:[%s0 + $0x180] sm:$0xff]
    %v85 = vld [vmem:[%s0 + $0x188] sm:$0xff]
    %v86 = vld [vmem:[%s0 + $0x190] sm:$0xff]
    %v87 = vld [vmem:[%s0 + $0x198] sm:$0xff]
    %v88 = vld [vmem:[%s0 + $0x1a0] sm:$0xff]
    %v89 = vld [vmem:[%s0 + $0x1a8] sm:$0xff]
    %v90 = vld [vmem:[%s0 + $0x1b0] sm:$0xff]
    %v91 = vld [vmem:[%s0 + $0x1b8] sm:$0xff]
    %v92 = vld [vmem:[%s0 + $0x1c0] sm:$0xff]
    %v93 = vld [vmem:[%s0 + $0x1c8] sm:$0xff]
    %v94 = vld [vmem:[%s0 + $0x1d0] sm:$0xff]
    %v95 = vld [vmem:[%s0 + $0x1d8] sm:$0xff]
    %v96 = vld [vmem:[%s0 + $0x1e0] sm:$0xff]
    %v97 = vld [vmem:[%s0 + $0x1e8] sm:$0xff]
    %v98 = vld [vmem:[%s0 + $0x1f0] sm:$0xff]
    %v99 = vld [vmem:[%s0 + $0x1f8] sm:$0xff]
    %v100 = vpack.c.bf16 %v37, %v36
    %v101 = vpack.c.bf16 %v39, %v38
    %v102 = vpack.c.bf16 %v41, %v40
    %v103 = vpack.c.bf16 %v43, %v42
    %v104 = vpack.c.bf16 %v45, %v44
    %v105 = vpack.c.bf16 %v47, %v46
    %v106 = vpack.c.bf16 %v49, %v48
    %v107 = vpack.c.bf16 %v51, %v50
    %v108 = vpack.c.bf16 %v53, %v52
    %v109 = vpack.c.bf16 %v55, %v54
    %v110 = vpack.c.bf16 %v57, %v56
    %v111 = vpack.c.bf16 %v59, %v58
    %v112 = vpack.c.bf16 %v61, %v60
    %v113 = vpack.c.bf16 %v63, %v62
    %v114 = vpack.c.bf16 %v65, %v64
    %v115 = vpack.c.bf16 %v67, %v66
    %v116 = vpack.c.bf16 %v69, %v68
    %v117 = vpack.c.bf16 %v71, %v70
    %v118 = vpack.c.bf16 %v73, %v72
    %v119 = vpack.c.bf16 %v75, %v74
    %v120 = vpack.c.bf16 %v77, %v76
    %v121 = vpack.c.bf16 %v79, %v78
    %v122 = vpack.c.bf16 %v81, %v80
    %v123 = vpack.c.bf16 %v83, %v82
    %v124 = vpack.c.bf16 %v85, %v84
    %v125 = vpack.c.bf16 %v87, %v86
    %v126 = vpack.c.bf16 %v89, %v88
    %v127 = vpack.c.bf16 %v91, %v90
    %v128 = vpack.c.bf16 %v93, %v92
    %v129 = vpack.c.bf16 %v95, %v94
    %v130 = vpack.c.bf16 %v97, %v96
    %v131 = vpack.c.bf16 %v99, %v98
    %v132 = vld [vmem:[%s1] sm:$0xf]
    %v133 = vld [vmem:[%s1 + $0x4] sm:$0xf]
    %v134 = vld [vmem:[%s1 + $0x8] sm:$0xf]
    %v135 = vld [vmem:[%s1 + $0xc] sm:$0xf]
    %v136 = vld [vmem:[%s2] sm:$0xff]
    %v137 = vld [vmem:[%s2 + $0x8] sm:$0xff]
    %v138 = vld [vmem:[%s2 + $0x10] sm:$0xff]
    %v139 = vld [vmem:[%s2 + $0x18] sm:$0xff]
    %141 = vset.pattern.permute.xlu0 0
    %142 = vperm.xlu0 %141, %v136
    %v143 = vpop.permute.xlu0 %142
    %146 = vset.pattern.permute.xlu0 0
    %147 = vperm.xlu0 %146, %v137
    %v148 = vpop.permute.xlu0 %147
    %151 = vset.pattern.permute.xlu0 0
    %152 = vperm.xlu0 %151, %v138
    %v153 = vpop.permute.xlu0 %152
    %156 = vset.pattern.permute.xlu0 0
    %157 = vperm.xlu0 %156, %v139
    %v158 = vpop.permute.xlu0 %157
    %v164 = vunpack.c.l.b16 %v132
    %v165 = vunpack.c.l.b16 %v133
    %v166 = vunpack.c.l.b16 %v134
    %v167 = vunpack.c.l.b16 %v135
    %v168 = vpack.c.b16 %v165, %v164
    %v169 = vpack.c.b16 %v167, %v166
    %vm170 = vcmask 130048
    %v172 = vsel %vm170, %v168, 0
    %v175 = vsel %vm170, %v169, 0
    %v178 = vsel %vm170, %v100, 0
    %v181 = vsel %vm170, %v101, 0
    %v184 = vsel %vm170, %v102, 0
    %v187 = vsel %vm170, %v103, 0
    %v190 = vsel %vm170, %v104, 0
    %v193 = vsel %vm170, %v105, 0
    %v196 = vsel %vm170, %v106, 0
    %v199 = vsel %vm170, %v107, 0
    %v202 = vsel %vm170, %v108, 0
    %v205 = vsel %vm170, %v109, 0
    %v208 = vsel %vm170, %v110, 0
    %v211 = vsel %vm170, %v111, 0
    %v214 = vsel %vm170, %v112, 0
    %v217 = vsel %vm170, %v113, 0
    %v220 = vsel %vm170, %v114, 0
    %v223 = vsel %vm170, %v115, 0
    %v226 = vsel %vm170, %v116, 0
    %v229 = vsel %vm170, %v117, 0
    %v232 = vsel %vm170, %v118, 0
    %v235 = vsel %vm170, %v119, 0
    %v238 = vsel %vm170, %v120, 0
    %v241 = vsel %vm170, %v121, 0
    %v244 = vsel %vm170, %v122, 0
    %v247 = vsel %vm170, %v123, 0
    %v250 = vsel %vm170, %v124, 0
    %v253 = vsel %vm170, %v125, 0
    %v256 = vsel %vm170, %v126, 0
    %v259 = vsel %vm170, %v127, 0
    %v262 = vsel %vm170, %v128, 0
    %v265 = vsel %vm170, %v129, 0
    %v268 = vsel %vm170, %v130, 0
    %v271 = vsel %vm170, %v131, 0
    %273 = vmatpush.bf16.xpose.msra.mxu0 %v199
    %274 = vmatpush.bf16.xpose.msra.mxu0 %v196
    %275 = vmatpush.bf16.xpose.msra.mxu0 %v193
    %276 = vmatpush.bf16.xpose.msra.mxu0 %v190
    %277 = vmatpush.bf16.xpose.msra.mxu0 %v187
    %278 = vmatpush.bf16.xpose.msra.mxu0 %v184
    %279 = vmatpush.bf16.xpose.msra.mxu0 %v181
    %280 = vmatpush.bf16.xpose.msra.mxu0 %v178
    %281 = vmatmul.bf16.gmra.mxu0 %v172
    %v282 = vpop.f32.mrf.mxu0
    %v283 = vadd.f32 %v143, %v282
    %v284 = vpop.f32.mrf.mxu0
    %v285 = vadd.f32 %v148, %v284
    %286 = vmatmul.bf16.gmra.mxu0 %v175
    %v287 = vpop.f32.mrf.mxu0
    %v288 = vadd.f32 %v153, %v287
    %v289 = vpop.f32.mrf.mxu0
    %v290 = vadd.f32 %v158, %v289
    %291 = vdwg.mxu0
    %292 = vmatpush.bf16.xpose.msra.mxu0 %v223
    %293 = vmatpush.bf16.xpose.msra.mxu0 %v220
    %294 = vmatpush.bf16.xpose.msra.mxu0 %v217
    %295 = vmatpush.bf16.xpose.msra.mxu0 %v214
    %296 = vmatpush.bf16.xpose.msra.mxu0 %v211
    %297 = vmatpush.bf16.xpose.msra.mxu0 %v208
    %298 = vmatpush.bf16.xpose.msra.mxu0 %v205
    %299 = vmatpush.bf16.xpose.msra.mxu0 %v202
    %300 = vmatmul.bf16.gmra.mxu0 %v172
    %v301 = vpop.f32.mrf.mxu0
    %v302 = vadd.f32 %v143, %v301
    %v303 = vpop.f32.mrf.mxu0
    %v304 = vadd.f32 %v148, %v303
    %305 = vmatmul.bf16.gmra.mxu0 %v175
    %v306 = vpop.f32.mrf.mxu0
    %v307 = vadd.f32 %v153, %v306
    %v308 = vpop.f32.mrf.mxu0
    %v309 = vadd.f32 %v158, %v308
    %310 = vdwg.mxu0
    %311 = vmatpush.bf16.xpose.msra.mxu0 %v247
    %312 = vmatpush.bf16.xpose.msra.mxu0 %v244
    %313 = vmatpush.bf16.xpose.msra.mxu0 %v241
    %314 = vmatpush.bf16.xpose.msra.mxu0 %v238
    %315 = vmatpush.bf16.xpose.msra.mxu0 %v235
    %316 = vmatpush.bf16.xpose.msra.mxu0 %v232
    %317 = vmatpush.bf16.xpose.msra.mxu0 %v229
    %318 = vmatpush.bf16.xpose.msra.mxu0 %v226
    %319 = vmatmul.bf16.gmra.mxu0 %v172
    %v320 = vpop.f32.mrf.mxu0
    %v321 = vadd.f32 %v143, %v320
    %v322 = vpop.f32.mrf.mxu0
    %v323 = vadd.f32 %v148, %v322
    %324 = vmatmul.bf16.gmra.mxu0 %v175
    %v325 = vpop.f32.mrf.mxu0
    %v326 = vadd.f32 %v153, %v325
    %v327 = vpop.f32.mrf.mxu0
    %v328 = vadd.f32 %v158, %v327
    %329 = vdwg.mxu0
    %330 = vmatpush.bf16.xpose.msra.mxu0 %v271
    %331 = vmatpush.bf16.xpose.msra.mxu0 %v268
    %332 = vmatpush.bf16.xpose.msra.mxu0 %v265
    %333 = vmatpush.bf16.xpose.msra.mxu0 %v262
    %334 = vmatpush.bf16.xpose.msra.mxu0 %v259
    %335 = vmatpush.bf16.xpose.msra.mxu0 %v256
    %336 = vmatpush.bf16.xpose.msra.mxu0 %v253
    %337 = vmatpush.bf16.xpose.msra.mxu0 %v250
    %338 = vmatmul.bf16.gmra.mxu0 %v172
    %v339 = vpop.f32.mrf.mxu0
    %v340 = vadd.f32 %v143, %v339
    %v341 = vpop.f32.mrf.mxu0
    %v342 = vadd.f32 %v148, %v341
    %343 = vmatmul.bf16.gmra.mxu0 %v175
    %v344 = vpop.f32.mrf.mxu0
    %v345 = vadd.f32 %v153, %v344
    %v346 = vpop.f32.mrf.mxu0
    %v347 = vadd.f32 %v158, %v346
    %348 = vdwg.mxu0
    %v349 = vmax.f32 %v283, 0.0
    %v350 = vmax.f32 %v302, 0.0
    %v351 = vmax.f32 %v321, 0.0
    %v352 = vmax.f32 %v340, 0.0
    %v353 = vmax.f32 %v285, 0.0
    %v354 = vmax.f32 %v304, 0.0
    %v355 = vmax.f32 %v323, 0.0
    %v356 = vmax.f32 %v342, 0.0
    %v357 = vmax.f32 %v288, 0.0
    %v358 = vmax.f32 %v307, 0.0
    %v359 = vmax.f32 %v326, 0.0
    %v360 = vmax.f32 %v345, 0.0
    %v361 = vmax.f32 %v290, 0.0
    %v362 = vmax.f32 %v309, 0.0
    %v363 = vmax.f32 %v328, 0.0
    %v364 = vmax.f32 %v347, 0.0
    %v365 = vld [vmem:[%s3] sm:$0xf]
    %v366 = vld [vmem:[%s3 + $0x4] sm:$0xf]
    %v367 = vld [vmem:[%s3 + $0x8] sm:$0xf]
    %v368 = vld [vmem:[%s3 + $0xc] sm:$0xf]
    %v369 = vpack.c.bf16 %v353, %v349
    %v370 = vpack.c.bf16 %v354, %v350
    %v371 = vpack.c.bf16 %v355, %v351
    %v372 = vpack.c.bf16 %v356, %v352
    %v373 = vpack.c.bf16 %v361, %v357
    %v374 = vpack.c.bf16 %v362, %v358
    %v375 = vpack.c.bf16 %v363, %v359
    %v376 = vpack.c.bf16 %v364, %v360
    %v377 = vld [vmem:[%s4] sm:$0xff]
    %v378 = vld [vmem:[%s4 + $0x8] sm:$0xff]
    %v379 = vld [vmem:[%s4 + $0x10] sm:$0xff]
    %v380 = vld [vmem:[%s4 + $0x18] sm:$0xff]
    %382 = vset.pattern.permute.xlu0 0
    %383 = vperm.xlu0 %382, %v377
    %v384 = vpop.permute.xlu0 %383
    %387 = vset.pattern.permute.xlu0 0
    %388 = vperm.xlu0 %387, %v378
    %v389 = vpop.permute.xlu0 %388
    %392 = vset.pattern.permute.xlu0 0
    %393 = vperm.xlu0 %392, %v379
    %v394 = vpop.permute.xlu0 %393
    %397 = vset.pattern.permute.xlu0 0
    %398 = vperm.xlu0 %397, %v380
    %v399 = vpop.permute.xlu0 %398
    %v405 = vunpack.c.l.b16 %v365
    %v406 = vunpack.c.l.b16 %v366
    %v407 = vunpack.c.l.b16 %v367
    %v408 = vunpack.c.l.b16 %v368
    %v409 = vpack.c.b16 %v406, %v405
    %v410 = vpack.c.b16 %v408, %v407
    %vm411 = vcmask 261120
    %v413 = vsel %vm411, %v409, 0
    %v416 = vsel %vm411, %v410, 0
    %418 = vmatpush.bf16.msra.mxu0 0
    %419 = vmatpush.bf16.msra.mxu0 0
    %420 = vmatpush.bf16.msra.mxu0 0
    %421 = vmatpush.bf16.msra.mxu0 0
    %422 = vmatpush.bf16.msra.mxu0 0
    %423 = vmatpush.bf16.msra.mxu0 0
    %424 = vmatpush.bf16.msra.mxu0 %v373
    %425 = vmatpush.bf16.msra.mxu0 %v369
    %426 = vmatmul.bf16.gmra.mxu0 %v413
    %v427 = vpop.f32.mrf.mxu0
    %v428 = vadd.f32 %v384, %v427
    %v429 = vpop.f32.mrf.mxu0
    %v430 = vadd.f32 %v389, %v429
    %431 = vmatmul.bf16.gmra.mxu0 %v416
    %v432 = vpop.f32.mrf.mxu0
    %v433 = vadd.f32 %v394, %v432
    %v434 = vpop.f32.mrf.mxu0
    %v435 = vadd.f32 %v399, %v434
    %436 = vdwg.mxu0
    %437 = vmatpush.bf16.msra.mxu0 0
    %438 = vmatpush.bf16.msra.mxu0 0
    %439 = vmatpush.bf16.msra.mxu0 0
    %440 = vmatpush.bf16.msra.mxu0 0
    %441 = vmatpush.bf16.msra.mxu0 0
    %442 = vmatpush.bf16.msra.mxu0 0
    %443 = vmatpush.bf16.msra.mxu0 %v374
    %444 = vmatpush.bf16.msra.mxu0 %v370
    %445 = vmatmul.bf16.gmra.mxu0 %v413
    %v446 = vpop.f32.mrf.mxu0
    %v447 = vadd.f32 %v384, %v446
    %v448 = vpop.f32.mrf.mxu0
    %v449 = vadd.f32 %v389, %v448
    %450 = vmatmul.bf16.gmra.mxu0 %v416
    %v451 = vpop.f32.mrf.mxu0
    %v452 = vadd.f32 %v394, %v451
    %v453 = vpop.f32.mrf.mxu0
    %v454 = vadd.f32 %v399, %v453
    %455 = vdwg.mxu0
    %456 = vmatpush.bf16.msra.mxu0 0
    %457 = vmatpush.bf16.msra.mxu0 0
    %458 = vmatpush.bf16.msra.mxu0 0
    %459 = vmatpush.bf16.msra.mxu0 0
    %460 = vmatpush.bf16.msra.mxu0 0
    %461 = vmatpush.bf16.msra.mxu0 0
    %462 = vmatpush.bf16.msra.mxu0 %v375
    %463 = vmatpush.bf16.msra.mxu0 %v371
    %464 = vmatmul.bf16.gmra.mxu0 %v413
    %v465 = vpop.f32.mrf.mxu0
    %v466 = vadd.f32 %v384, %v465
    %v467 = vpop.f32.mrf.mxu0
    %v468 = vadd.f32 %v389, %v467
    %469 = vmatmul.bf16.gmra.mxu0 %v416
    %v470 = vpop.f32.mrf.mxu0
    %v471 = vadd.f32 %v394, %v470
    %v472 = vpop.f32.mrf.mxu0
    %v473 = vadd.f32 %v399, %v472
    %474 = vdwg.mxu0
    %475 = vmatpush.bf16.msra.mxu0 0
    %476 = vmatpush.bf16.msra.mxu0 0
    %477 = vmatpush.bf16.msra.mxu0 0
    %478 = vmatpush.bf16.msra.mxu0 0
    %479 = vmatpush.bf16.msra.mxu0 0
    %480 = vmatpush.bf16.msra.mxu0 0
    %481 = vmatpush.bf16.msra.mxu0 %v376
    %482 = vmatpush.bf16.msra.mxu0 %v372
    %483 = vmatmul.bf16.gmra.mxu0 %v413
    %v484 = vpop.f32.mrf.mxu0
    %v485 = vadd.f32 %v384, %v484
    %v486 = vpop.f32.mrf.mxu0
    %v487 = vadd.f32 %v389, %v486
    %488 = vmatmul.bf16.gmra.mxu0 %v416
    %v489 = vpop.f32.mrf.mxu0
    %v490 = vadd.f32 %v394, %v489
    %v491 = vpop.f32.mrf.mxu0
    %v492 = vadd.f32 %v399, %v491
    %493 = vdwg.mxu0
    %v494 = vmax.f32 %v428, 0.0
    %v495 = vmax.f32 %v447, 0.0
    %v496 = vmax.f32 %v466, 0.0
    %v497 = vmax.f32 %v485, 0.0
    %v498 = vmax.f32 %v430, 0.0
    %v499 = vmax.f32 %v449, 0.0
    %v500 = vmax.f32 %v468, 0.0
    %v501 = vmax.f32 %v487, 0.0
    %v502 = vmax.f32 %v433, 0.0
    %v503 = vmax.f32 %v452, 0.0
    %v504 = vmax.f32 %v471, 0.0
    %v505 = vmax.f32 %v490, 0.0
    %v506 = vmax.f32 %v435, 0.0
    %v507 = vmax.f32 %v454, 0.0
    %v508 = vmax.f32 %v473, 0.0
    %v509 = vmax.f32 %v492, 0.0
    %v510 = vld [vmem:[%s5] sm:$0xf]
    %v511 = vld [vmem:[%s5 + $0x4] sm:$0xf]
    %v512 = vld [vmem:[%s5 + $0x8] sm:$0xf]
    %v513 = vld [vmem:[%s5 + $0xc] sm:$0xf]
    %v514 = vpack.c.bf16 %v498, %v494
    %v515 = vpack.c.bf16 %v499, %v495
    %v516 = vpack.c.bf16 %v500, %v496
    %v517 = vpack.c.bf16 %v501, %v497
    %v518 = vpack.c.bf16 %v506, %v502
    %v519 = vpack.c.bf16 %v507, %v503
    %v520 = vpack.c.bf16 %v508, %v504
    %v521 = vpack.c.bf16 %v509, %v505
    %v522 = vld [vmem:[%s6] sm:$0xff]
    %v523 = vld [vmem:[%s6 + $0x8] sm:$0xff]
    %v524 = vld [vmem:[%s6 + $0x10] sm:$0xff]
    %v525 = vld [vmem:[%s6 + $0x18] sm:$0xff]
    %527 = vset.pattern.permute.xlu0 0
    %528 = vperm.xlu0 %527, %v522
    %v529 = vpop.permute.xlu0 %528
    %532 = vset.pattern.permute.xlu0 0
    %533 = vperm.xlu0 %532, %v523
    %v534 = vpop.permute.xlu0 %533
    %537 = vset.pattern.permute.xlu0 0
    %538 = vperm.xlu0 %537, %v524
    %v539 = vpop.permute.xlu0 %538
    %542 = vset.pattern.permute.xlu0 0
    %543 = vperm.xlu0 %542, %v525
    %v544 = vpop.permute.xlu0 %543
    %v550 = vunpack.c.l.b16 %v510
    %v551 = vunpack.c.l.b16 %v511
    %v552 = vunpack.c.l.b16 %v512
    %v553 = vunpack.c.l.b16 %v513
    %v554 = vpack.c.b16 %v551, %v550
    %v555 = vpack.c.b16 %v553, %v552
    %v557 = vsel %vm411, %v554, 0
    %v560 = vsel %vm411, %v555, 0
    %562 = vmatpush.bf16.msra.mxu0 0
    %563 = vmatpush.bf16.msra.mxu0 0
    %564 = vmatpush.bf16.msra.mxu0 0
    %565 = vmatpush.bf16.msra.mxu0 0
    %566 = vmatpush.bf16.msra.mxu0 0
    %567 = vmatpush.bf16.msra.mxu0 0
    %568 = vmatpush.bf16.msra.mxu0 %v518
    %569 = vmatpush.bf16.msra.mxu0 %v514
    %570 = vmatmul.bf16.gmra.mxu0 %v557
    %v571 = vpop.f32.mrf.mxu0
    %v572 = vadd.f32 %v529, %v571
    %v573 = vpop.f32.mrf.mxu0
    %v574 = vadd.f32 %v534, %v573
    %575 = vmatmul.bf16.gmra.mxu0 %v560
    %v576 = vpop.f32.mrf.mxu0
    %v577 = vadd.f32 %v539, %v576
    %v578 = vpop.f32.mrf.mxu0
    %v579 = vadd.f32 %v544, %v578
    %580 = vdwg.mxu0
    %581 = vmatpush.bf16.msra.mxu0 0
    %582 = vmatpush.bf16.msra.mxu0 0
    %583 = vmatpush.bf16.msra.mxu0 0
    %584 = vmatpush.bf16.msra.mxu0 0
    %585 = vmatpush.bf16.msra.mxu0 0
    %586 = vmatpush.bf16.msra.mxu0 0
    %587 = vmatpush.bf16.msra.mxu0 %v519
    %588 = vmatpush.bf16.msra.mxu0 %v515
    %589 = vmatmul.bf16.gmra.mxu0 %v557
    %v590 = vpop.f32.mrf.mxu0
    %v591 = vadd.f32 %v529, %v590
    %v592 = vpop.f32.mrf.mxu0
    %v593 = vadd.f32 %v534, %v592
    %594 = vmatmul.bf16.gmra.mxu0 %v560
    %v595 = vpop.f32.mrf.mxu0
    %v596 = vadd.f32 %v539, %v595
    %v597 = vpop.f32.mrf.mxu0
    %v598 = vadd.f32 %v544, %v597
    %599 = vdwg.mxu0
    %600 = vmatpush.bf16.msra.mxu0 0
    %601 = vmatpush.bf16.msra.mxu0 0
    %602 = vmatpush.bf16.msra.mxu0 0
    %603 = vmatpush.bf16.msra.mxu0 0
    %604 = vmatpush.bf16.msra.mxu0 0
    %605 = vmatpush.bf16.msra.mxu0 0
    %606 = vmatpush.bf16.msra.mxu0 %v520
    %607 = vmatpush.bf16.msra.mxu0 %v516
    %608 = vmatmul.bf16.gmra.mxu0 %v557
    %v609 = vpop.f32.mrf.mxu0
    %v610 = vadd.f32 %v529, %v609
    %v611 = vpop.f32.mrf.mxu0
    %v612 = vadd.f32 %v534, %v611
    %613 = vmatmul.bf16.gmra.mxu0 %v560
    %v614 = vpop.f32.mrf.mxu0
    %v615 = vadd.f32 %v539, %v614
    %v616 = vpop.f32.mrf.mxu0
    %v617 = vadd.f32 %v544, %v616
    %618 = vdwg.mxu0
    %619 = vmatpush.bf16.msra.mxu0 0
    %620 = vmatpush.bf16.msra.mxu0 0
    %621 = vmatpush.bf16.msra.mxu0 0
    %622 = vmatpush.bf16.msra.mxu0 0
    %623 = vmatpush.bf16.msra.mxu0 0
    %624 = vmatpush.bf16.msra.mxu0 0
    %625 = vmatpush.bf16.msra.mxu0 %v521
    %626 = vmatpush.bf16.msra.mxu0 %v517
    %627 = vmatmul.bf16.gmra.mxu0 %v557
    %v628 = vpop.f32.mrf.mxu0
    %v629 = vadd.f32 %v529, %v628
    %v630 = vpop.f32.mrf.mxu0
    %v631 = vadd.f32 %v534, %v630
    %632 = vmatmul.bf16.gmra.mxu0 %v560
    %v633 = vpop.f32.mrf.mxu0
    %v634 = vadd.f32 %v539, %v633
    %v635 = vpop.f32.mrf.mxu0
    %v636 = vadd.f32 %v544, %v635
    %637 = vdwg.mxu0
    %v638 = vmax.f32 %v572, 0.0
    %v639 = vmax.f32 %v591, 0.0
    %v640 = vmax.f32 %v610, 0.0
    %v641 = vmax.f32 %v629, 0.0
    %v642 = vmax.f32 %v574, 0.0
    %v643 = vmax.f32 %v593, 0.0
    %v644 = vmax.f32 %v612, 0.0
    %v645 = vmax.f32 %v631, 0.0
    %v646 = vmax.f32 %v577, 0.0
    %v647 = vmax.f32 %v596, 0.0
    %v648 = vmax.f32 %v615, 0.0
    %v649 = vmax.f32 %v634, 0.0
    %v650 = vmax.f32 %v579, 0.0
    %v651 = vmax.f32 %v598, 0.0
    %v652 = vmax.f32 %v617, 0.0
    %v653 = vmax.f32 %v636, 0.0
    %v654 = vld [vmem:[%s7] sm:$0x1]
    %v655 = vpack.c.bf16 %v642, %v638
    %v656 = vpack.c.bf16 %v643, %v639
    %v657 = vpack.c.bf16 %v644, %v640
    %v658 = vpack.c.bf16 %v645, %v641
    %v659 = vpack.c.bf16 %v650, %v646
    %v660 = vpack.c.bf16 %v651, %v647
    %v661 = vpack.c.bf16 %v652, %v648
    %v662 = vpack.c.bf16 %v653, %v649
    %v663 = vld [vmem:[#allocation2] sm:$0x1]
    %665 = vset.pattern.permute.xlu0 0
    %666 = vperm.xlu0 %665, %v663
    %v667 = vpop.permute.xlu0 %666
    %v669 = vperm.slane %v667, 0
    %v671 = vsel %vm411, %v654, 0
    %673 = vmatpush.bf16.msra.mxu0 0
    %674 = vmatpush.bf16.msra.mxu0 0
    %675 = vmatpush.bf16.msra.mxu0 0
    %676 = vmatpush.bf16.msra.mxu0 0
    %677 = vmatpush.bf16.msra.mxu0 0
    %678 = vmatpush.bf16.msra.mxu0 0
    %679 = vmatpush.bf16.msra.mxu0 %v659
    %680 = vmatpush.bf16.msra.mxu0 %v655
    %681 = vmatmul.bf16.gmra.mxu0 %v671
    %v682 = vpop.f32.mrf.mxu0
    %v683 = vadd.f32 %v669, %v682
    %v684 = vpop.f32.mrf.mxu0
    %685 = vdwg.mxu0
    %686 = vmatpush.bf16.msra.mxu0 0
    %687 = vmatpush.bf16.msra.mxu0 0
    %688 = vmatpush.bf16.msra.mxu0 0
    %689 = vmatpush.bf16.msra.mxu0 0
    %690 = vmatpush.bf16.msra.mxu0 0
    %691 = vmatpush.bf16.msra.mxu0 0
    %692 = vmatpush.bf16.msra.mxu0 %v660
    %693 = vmatpush.bf16.msra.mxu0 %v656
    %694 = vmatmul.bf16.gmra.mxu0 %v671
    %v695 = vpop.f32.mrf.mxu0
    %v696 = vadd.f32 %v669, %v695
    %v697 = vpop.f32.mrf.mxu0
    %698 = vdwg.mxu0
    %699 = vmatpush.bf16.msra.mxu0 0
    %700 = vmatpush.bf16.msra.mxu0 0
    %701 = vmatpush.bf16.msra.mxu0 0
    %702 = vmatpush.bf16.msra.mxu0 0
    %703 = vmatpush.bf16.msra.mxu0 0
    %704 = vmatpush.bf16.msra.mxu0 0
    %705 = vmatpush.bf16.msra.mxu0 %v661
    %706 = vmatpush.bf16.msra.mxu0 %v657
    %707 = vmatmul.bf16.gmra.mxu0 %v671
    %v708 = vpop.f32.mrf.mxu0
    %v709 = vadd.f32 %v669, %v708
    %v710 = vpop.f32.mrf.mxu0
    %711 = vdwg.mxu0
    %712 = vmatpush.bf16.msra.mxu0 0
    %713 = vmatpush.bf16.msra.mxu0 0
    %714 = vmatpush.bf16.msra.mxu0 0
    %715 = vmatpush.bf16.msra.mxu0 0
    %716 = vmatpush.bf16.msra.mxu0 0
    %717 = vmatpush.bf16.msra.mxu0 0
    %718 = vmatpush.bf16.msra.mxu0 %v662
    %719 = vmatpush.bf16.msra.mxu0 %v658
    %720 = vmatmul.bf16.gmra.mxu0 %v671
    %v721 = vpop.f32.mrf.mxu0
    %v722 = vadd.f32 %v669, %v721
    %v723 = vpop.f32.mrf.mxu0
    %724 = vdwg.mxu0
    %v729 = vrot.slane %v696, 7
    %v730 = vrot.slane %v709, 6
    %v731 = vrot.slane %v722, 5
    %vm732 = vcmask 1040384
    %v733 = vsel %vm732, %v683, %v729
    %vm734 = vcmask 1042434
    %v735 = vsel %vm734, %v730, %v731
    %vm736 = vcmask 1041408
    %v737 = vsel %vm736, %v733, %v735
    %v739 = vlaneseq
    %vm740 = vcmp.ge.s32.totalorder %v739, 0
    %vm741 = vcmp.lt.s32.totalorder %v739, 512
    %vm742 = vmand %vm740, %vm741
    %743 = vst.msk [vmem:[#allocation3] sm:$0xf] %vm742, %v737
    // Predicated region
    $region38: #{tpu_custom_call.1} parent=1 // pred_check
      _
    $region39: #{tpu_custom_call.1} parent=1 // pred_check_branch
      %745 = sbr.rel (0) target = $region41
    $region40: #{tpu_custom_call.1} parent=1 // pred_region
      %747 = vsyncadd [#allocation4], 0
      %s749 = sshll.u32 [#allocation3], 4
      %s750 = int_to_ptr.vmem [resolvable:$true] %s749
      %s751 = sshll.u32 %s9, 4
      %s752 = int_to_ptr.hbm [resolvable:$true] %s751
      %754 = dma.vmem_to_hbm [thread:$0]  %s750, 64, %s752, [#allocation4]
    $region41: #{tpu_custom_call.1} parent=1 // pred_fallthru
      _
    // Predicated region
    $region42: #{tpu_custom_call.1} parent=1 // pred_check
      _
    $region43: #{tpu_custom_call.1} parent=1 // pred_check_branch
      %756 = sbr.rel (0) target = $region45
    $region44: #{tpu_custom_call.1} parent=1 // pred_region
      %758 = dma.done [#allocation4], 64
    $region45: #{tpu_custom_call.1} parent=1 // pred_fallthru
      _
    %759 = vsyncpa [#allocation4], 1

</llo_original>
